<compile_context>
chip_gen: v6e
topology: v6e:2x2x1
jax: 0.10.0
libtpu: 0.0.40
codegen_flags: <defaults>
</compile_context>

<pallas_src>
import functools

import jax
import jax.numpy as jnp
from jax.experimental import pallas as pl
from jax.experimental.pallas import tpu as pltpu

# Global from the reference script (t is normalized by this in forward()).
CURRENT_DIFFUSION_STEPS = 1000.0


def _mlp_kernel(x_ref, t_ref, w1x_ref, w1t_ref, b1_ref, w2_ref, b2_ref,
                w3_ref, b3_ref, o_ref):
    """relu(x@W1x + t*w1t + b1) -> @W2+b2 -> relu -> @W3+b3, f32 accumulation."""
    x = x_ref[...].astype(jnp.bfloat16)               # f32 HBM read, VPU cast
    t = t_ref[...]                                    # f32 [bb, 1]

    h1 = jnp.dot(x, w1x_ref[...], preferred_element_type=jnp.float32)
    # Rank-1 timestep term (replaces the concatenated 17th input column).
    h1 = h1 + t * w1t_ref[...].astype(jnp.float32) + b1_ref[...]
    h1 = jnp.maximum(h1, 0.0).astype(w2_ref.dtype)    # back to bf16 for the MXU

    h2 = jnp.dot(h1, w2_ref[...], preferred_element_type=jnp.float32)
    h2 = jnp.maximum(h2 + b2_ref[...], 0.0).astype(w3_ref.dtype)

    out = jnp.dot(h2, w3_ref[...], preferred_element_type=jnp.float32)
    o_ref[...] = (out + b3_ref[...]).astype(o_ref.dtype)


@functools.partial(jax.jit, static_argnames=("block_b",))
def diffusion_mlp_forward(x, t, params, block_b=None):
    """x: [B, input_dim] f32, t: [B] int/float -> [B, input_dim] f32."""
    w1x, w1t, b1, w2, b2, w3, b3 = params
    B, input_dim = x.shape
    hidden_dim = w1x.shape[1]

    # Cheap glue (matches torch forward); t_norm stays f32.
    t_norm = t.astype(jnp.float32)[:, None] / CURRENT_DIFFUSION_STEPS

    # --- generation-aware VMEM budget --------------------------------------
    try:
        info = pltpu.get_tpu_info()
        vmem_cap = int(getattr(info, "vmem_capacity_bytes", 64 * 1024 * 1024))
    except Exception:  # not on TPU / query unavailable
        vmem_cap = 64 * 1024 * 1024
    # ~85% of physical VMEM: ~109 MiB on v5e/v6e, ~54 MiB on v7x -> headroom
    # for compiler-internal scratch is preserved on every generation.
    vmem_budget = int(0.85 * vmem_cap)

    w_itemsize = w1x.dtype.itemsize                              # bf16 -> 2
    out_itemsize = x.dtype.itemsize                              # f32  -> 4
    bytes_w = (w1x.size + w1t.size + w2.size + w3.size) * w_itemsize
    bytes_bias = (b1.size + b2.size + b3.size) * 4               # f32

    # Per-batch-row VMEM: double-buffered streamed tiles (x f32, t f32, out)
    # plus the f32 h1/h2 intermediates and their bf16 copies live in compute.
    stream_row = 2 * (input_dim * 4 + 4 + input_dim * out_itemsize)
    live_row = 2 * hidden_dim * 4 + 2 * hidden_dim * 2 + input_dim * 2
    row_bytes = stream_row + live_row

    # --- batch tiling: derive block_b from the VMEM budget ------------------
    if block_b is None:
        avail = max(vmem_budget - (bytes_w + bytes_bias), 1 << 20)
        block_b = max(8, min(4096, (avail // row_bytes) // 8 * 8))
    block_b = min(B, max(8, 8 * pl.cdiv(block_b, 8)))
    # v7x megacore: guarantee >= 2 "parallel" grid steps for mid/large batches
    # so both TensorCores get work.
    if B >= 32:
        block_b = min(block_b, 8 * pl.cdiv(pl.cdiv(B, 2), 8))
    grid = (pl.cdiv(B, block_b),)

    # --- VMEM estimate with the *actual* buffer counts ----------------------
    bytes_x = block_b * input_dim * 4
    bytes_t = block_b * 4
    bytes_o = block_b * input_dim * out_itemsize
    vmem_est = ((bytes_w + bytes_bias)                 # single-buffered weights
                + 2 * (bytes_x + bytes_t + bytes_o)    # double-buffered streams
                + block_b * live_row)                  # h1/h2 etc. during compute
    vmem_limit = int(min(vmem_budget, max(16 << 20, int(vmem_est * 1.5))))

    # Constant index_map -> a second buffer buys zero overlap; single-buffer
    # unconditionally so resident weights cost their raw size only.
    def const_spec(shape):
        return pl.BlockSpec(shape, lambda *_: (0,) * len(shape),
                            pipeline_mode=pl.Buffered(1))

    # TODO(synk): for hidden_dim >= ~2048, add a second "arbitrary" grid axis
    # tiling W2/W3 along their output dim (multiples of 256) so W2 need not be
    # fully VMEM-resident; unnecessary at the sizes exercised here.

    flops = 2 * B * (input_dim * hidden_dim + hidden_dim * hidden_dim
                     + hidden_dim * input_dim + hidden_dim)
    bytes_accessed = (B * input_dim * 4 + B * 4            # x, t_norm reads
                      + bytes_w + bytes_bias               # weights/biases
                      + B * input_dim * out_itemsize)      # output write
    cost = pl.CostEstimate(flops=int(flops), transcendentals=0,
                           bytes_accessed=int(bytes_accessed))

    # If profiling shows exposed input DMA at large block_b, bump the x/t/out
    # streaming specs (only) to pipeline_mode=pl.Buffered(3).
    return pl.pallas_call(
        _mlp_kernel,
        out_shape=jax.ShapeDtypeStruct((B, input_dim), x.dtype),
        grid_spec=pltpu.PrefetchScalarGridSpec(
            num_scalar_prefetch=0,
            grid=grid,
            in_specs=[
                pl.BlockSpec((block_b, input_dim), lambda i: (i, 0)),  # x (f32)
                pl.BlockSpec((block_b, 1), lambda i: (i, 0)),          # t_norm (f32)
                const_spec((input_dim, hidden_dim)),                   # W1 (x rows)
                const_spec((1, hidden_dim)),                           # W1 (t row)
                const_spec((1, hidden_dim)),                           # b1
                const_spec((hidden_dim, hidden_dim)),                  # W2
                const_spec((1, hidden_dim)),                           # b2
                const_spec((hidden_dim, input_dim)),                   # W3
                const_spec((1, input_dim)),                            # b3
            ],
            out_specs=pl.BlockSpec((block_b, input_dim), lambda i: (i, 0)),
        ),
        compiler_params=pltpu.CompilerParams(
            dimension_semantics=("parallel",),
            vmem_limit_bytes=vmem_limit,
        ),
        cost_estimate=cost,
    )(x, t_norm, w1x, w1t, b1, w2, b2, w3, b3)


def init_params(key, input_dim, hidden_dim):
    """Torch-default Linear init (U[-1/sqrt(fan_in), 1/sqrt(fan_in)]).

    Weights stored as [in_features, out_features], bf16.  W1 is split into its
    x-rows (W1x: [input_dim, hidden]) and its timestep row (w1t: [1, hidden]).
    Biases stay f32.  No output padding (the kernel writes (B, input_dim)).
    """
    ks = jax.random.split(key, 6)
    in_dim = input_dim + 1

    def lin(kw, kb, fan_in, fan_out):
        bound = 1.0 / jnp.sqrt(fan_in)
        w = jax.random.uniform(kw, (fan_in, fan_out), jnp.float32, -bound, bound)
        b = jax.random.uniform(kb, (1, fan_out), jnp.float32, -bound, bound)
        return w, b

    w1, b1 = lin(ks[0], ks[1], in_dim, hidden_dim)
    w2, b2 = lin(ks[2], ks[3], hidden_dim, hidden_dim)
    w3, b3 = lin(ks[4], ks[5], hidden_dim, input_dim)

    w1x = w1[:input_dim].astype(jnp.bfloat16)
    w1t = w1[input_dim:].astype(jnp.bfloat16)                 # [1, hidden]
    return (w1x, w1t, b1, w2.astype(jnp.bfloat16), b2,
            w3.astype(jnp.bfloat16), b3)


def reference_forward(x, t, params):
    """Plain-JAX reference mirroring the torch module semantics (f32 math on
    the same bf16-stored weights)."""
    w1x, w1t, b1, w2, b2, w3, b3 = params
    t_norm = t.astype(jnp.float32)[:, None] / CURRENT_DIFFUSION_STEPS
    h1 = x @ w1x.astype(jnp.float32) + t_norm * w1t.astype(jnp.float32) + b1
    h1 = jnp.maximum(h1, 0.0)
    h2 = jnp.maximum(h1 @ w2.astype(jnp.float32) + b2, 0.0)
    return h2 @ w3.astype(jnp.float32) + b3


if __name__ == "__main__":
    key = jax.random.PRNGKey(0)
    k_x, k_t, k_p = jax.random.split(key, 3)

    B = 8
    INPUT_DIM = 16
    HIDDEN_DIM = 32

    x = jax.random.normal(k_x, (B, INPUT_DIM), jnp.float32)
    t = jax.random.randint(k_t, (B,), 0, int(CURRENT_DIFFUSION_STEPS), jnp.int32)
    params = init_params(k_p, INPUT_DIM, HIDDEN_DIM)

    out = diffusion_mlp_forward(x, t, params)
    out = jax.block_until_ready(out)

    ref = reference_forward(x, t, params)
    assert out.shape == (B, INPUT_DIM)
    # bf16 weights/activations inside the kernel -> looser tolerance than pure f32.
    assert jnp.allclose(out, ref, atol=5e-2, rtol=5e-2), "mismatch vs reference"

    print("KERNEL_OK")
</pallas_src>

<mosaic_0001>
module attributes {stable_mosaic.version = 11 : i64} {
  func.func @_mlp_kernel(%arg0: i32, %arg1: memref<8x16xf32, #tpu.memory_space<vmem>>, %arg2: memref<8x1xf32, #tpu.memory_space<vmem>>, %arg3: memref<16x32xbf16, #tpu.memory_space<vmem>>, %arg4: memref<1x32xbf16, #tpu.memory_space<vmem>>, %arg5: memref<1x32xf32, #tpu.memory_space<vmem>>, %arg6: memref<32x32xbf16, #tpu.memory_space<vmem>>, %arg7: memref<1x32xf32, #tpu.memory_space<vmem>>, %arg8: memref<32x16xbf16, #tpu.memory_space<vmem>>, %arg9: memref<1x16xf32, #tpu.memory_space<vmem>>, %arg10: memref<8x16xf32, #tpu.memory_space<vmem>>) attributes {dimension_semantics = [#tpu.dimension_semantics<parallel>], iteration_bounds = array<i64: 1>, scalar_prefetch = 0 : i64, scratch_operands = 0 : i64, tpu.core_type = #tpu.core_type<tc>, window_params = [{transform_indices = @transform_0, window_bounds = array<i64: 8, 16>}, {transform_indices = @transform_1, window_bounds = array<i64: 8, 1>}, {pipeline_mode = #tpu.pipeline_mode<synchronous>, transform_indices = @transform_2, window_bounds = array<i64: 16, 32>}, {pipeline_mode = #tpu.pipeline_mode<synchronous>, transform_indices = @transform_3, window_bounds = array<i64: 1, 32>}, {pipeline_mode = #tpu.pipeline_mode<synchronous>, transform_indices = @transform_4, window_bounds = array<i64: 1, 32>}, {pipeline_mode = #tpu.pipeline_mode<synchronous>, transform_indices = @transform_5, window_bounds = array<i64: 32, 32>}, {pipeline_mode = #tpu.pipeline_mode<synchronous>, transform_indices = @transform_6, window_bounds = array<i64: 1, 32>}, {pipeline_mode = #tpu.pipeline_mode<synchronous>, transform_indices = @transform_7, window_bounds = array<i64: 32, 16>}, {pipeline_mode = #tpu.pipeline_mode<synchronous>, transform_indices = @transform_8, window_bounds = array<i64: 1, 16>}, {transform_indices = @transform_9, window_bounds = array<i64: 8, 16>}]} {
    %c0 = arith.constant 0 : index
    %c0_0 = arith.constant 0 : index
    %0 = vector.load %arg1[%c0, %c0_0] : memref<8x16xf32, #tpu.memory_space<vmem>>, vector<8x16xf32>
    %1 = arith.truncf %0 : vector<8x16xf32> to vector<8x16xbf16>
    %c0_1 = arith.constant 0 : index
    %c0_2 = arith.constant 0 : index
    %2 = vector.load %arg2[%c0_1, %c0_2] : memref<8x1xf32, #tpu.memory_space<vmem>>, vector<8x1xf32>
    %c0_3 = arith.constant 0 : index
    %c0_4 = arith.constant 0 : index
    %3 = vector.load %arg3[%c0_3, %c0_4] : memref<16x32xbf16, #tpu.memory_space<vmem>>, vector<16x32xbf16>
    %cst = arith.constant dense<0.000000e+00> : vector<8x32xf32>
    %4 = tpu.matmul %1, %3, %cst {dimension_numbers = #tpu.dot_dimension_numbers<[1], [0], [0], [1], [0, 0, 1, 1], [], []>} : vector<8x16xbf16>, vector<16x32xbf16>, vector<8x32xf32> -> vector<8x32xf32>
    %c0_5 = arith.constant 0 : index
    %c0_6 = arith.constant 0 : index
    %5 = vector.load %arg4[%c0_5, %c0_6] : memref<1x32xbf16, #tpu.memory_space<vmem>>, vector<1x32xbf16>
    %6 = arith.extf %5 : vector<1x32xbf16> to vector<1x32xf32>
    %7 = vector.broadcast %2 : vector<8x1xf32> to vector<8x32xf32>
    %8 = vector.broadcast %6 : vector<1x32xf32> to vector<8x32xf32>
    %9 = arith.mulf %7, %8 : vector<8x32xf32>
    %10 = arith.addf %4, %9 : vector<8x32xf32>
    %c0_7 = arith.constant 0 : index
    %c0_8 = arith.constant 0 : index
    %11 = vector.load %arg5[%c0_7, %c0_8] : memref<1x32xf32, #tpu.memory_space<vmem>>, vector<1x32xf32>
    %12 = vector.broadcast %11 : vector<1x32xf32> to vector<8x32xf32>
    %13 = arith.addf %10, %12 : vector<8x32xf32>
    %cst_9 = arith.constant 0.000000e+00 : f32
    %14 = vector.broadcast %cst_9 : f32 to vector<8x32xf32>
    %15 = arith.maximumf %13, %14 : vector<8x32xf32>
    %16 = arith.truncf %15 : vector<8x32xf32> to vector<8x32xbf16>
    %c0_10 = arith.constant 0 : index
    %c0_11 = arith.constant 0 : index
    %17 = vector.load %arg6[%c0_10, %c0_11] : memref<32x32xbf16, #tpu.memory_space<vmem>>, vector<32x32xbf16>
    %cst_12 = arith.constant dense<0.000000e+00> : vector<8x32xf32>
    %18 = tpu.matmul %16, %17, %cst_12 {dimension_numbers = #tpu.dot_dimension_numbers<[1], [0], [0], [1], [0, 0, 1, 1], [], []>} : vector<8x32xbf16>, vector<32x32xbf16>, vector<8x32xf32> -> vector<8x32xf32>
    %c0_13 = arith.constant 0 : index
    %c0_14 = arith.constant 0 : index
    %19 = vector.load %arg7[%c0_13, %c0_14] : memref<1x32xf32, #tpu.memory_space<vmem>>, vector<1x32xf32>
    %20 = vector.broadcast %19 : vector<1x32xf32> to vector<8x32xf32>
    %21 = arith.addf %18, %20 : vector<8x32xf32>
    %cst_15 = arith.constant 0.000000e+00 : f32
    %22 = vector.broadcast %cst_15 : f32 to vector<8x32xf32>
    %23 = arith.maximumf %21, %22 : vector<8x32xf32>
    %24 = arith.truncf %23 : vector<8x32xf32> to vector<8x32xbf16>
    %c0_16 = arith.constant 0 : index
    %c0_17 = arith.constant 0 : index
    %25 = vector.load %arg8[%c0_16, %c0_17] : memref<32x16xbf16, #tpu.memory_space<vmem>>, vector<32x16xbf16>
    %cst_18 = arith.constant dense<0.000000e+00> : vector<8x16xf32>
    %26 = tpu.matmul %24, %25, %cst_18 {dimension_numbers = #tpu.dot_dimension_numbers<[1], [0], [0], [1], [0, 0, 1, 1], [], []>} : vector<8x32xbf16>, vector<32x16xbf16>, vector<8x16xf32> -> vector<8x16xf32>
    %c0_19 = arith.constant 0 : index
    %c0_20 = arith.constant 0 : index
    %27 = vector.load %arg9[%c0_19, %c0_20] : memref<1x16xf32, #tpu.memory_space<vmem>>, vector<1x16xf32>
    %28 = vector.broadcast %27 : vector<1x16xf32> to vector<8x16xf32>
    %29 = arith.addf %26, %28 : vector<8x16xf32>
    %c0_21 = arith.constant 0 : index
    %c0_22 = arith.constant 0 : index
    %30 = vector.load %arg10[%c0_21, %c0_22] : memref<8x16xf32, #tpu.memory_space<vmem>>, vector<8x16xf32>
    tpu.vector_store %arg10[%c0_21, %c0_22], %29 {strides = array<i32>} : memref<8x16xf32, #tpu.memory_space<vmem>>, vector<8x16xf32>,
    return
  }
  func.func @transform_0(%arg0: i32) -> (i32, i32) {
    %c0_i32 = arith.constant 0 : i32
    %c0_i32_0 = arith.constant 0 : i32
    return %arg0, %c0_i32 : i32, i32
  }
  func.func @transform_1(%arg0: i32) -> (i32, i32) {
    %c0_i32 = arith.constant 0 : i32
    %c0_i32_0 = arith.constant 0 : i32
    return %arg0, %c0_i32 : i32, i32
  }
  func.func @transform_2(%arg0: i32) -> (i32, i32) {
    %c0_i32 = arith.constant 0 : i32
    %c0_i32_0 = arith.constant 0 : i32
    %c0_i32_1 = arith.constant 0 : i32
    return %c0_i32, %c0_i32_0 : i32, i32
  }
  func.func @transform_3(%arg0: i32) -> (i32, i32) {
    %c0_i32 = arith.constant 0 : i32
    %c0_i32_0 = arith.constant 0 : i32
    %c0_i32_1 = arith.constant 0 : i32
    return %c0_i32, %c0_i32_0 : i32, i32
  }
  func.func @transform_4(%arg0: i32) -> (i32, i32) {
    %c0_i32 = arith.constant 0 : i32
    %c0_i32_0 = arith.constant 0 : i32
    %c0_i32_1 = arith.constant 0 : i32
    return %c0_i32, %c0_i32_0 : i32, i32
  }
  func.func @transform_5(%arg0: i32) -> (i32, i32) {
    %c0_i32 = arith.constant 0 : i32
    %c0_i32_0 = arith.constant 0 : i32
    %c0_i32_1 = arith.constant 0 : i32
    return %c0_i32, %c0_i32_0 : i32, i32
  }
  func.func @transform_6(%arg0: i32) -> (i32, i32) {
    %c0_i32 = arith.constant 0 : i32
    %c0_i32_0 = arith.constant 0 : i32
    %c0_i32_1 = arith.constant 0 : i32
    return %c0_i32, %c0_i32_0 : i32, i32
  }
  func.func @transform_7(%arg0: i32) -> (i32, i32) {
    %c0_i32 = arith.constant 0 : i32
    %c0_i32_0 = arith.constant 0 : i32
    %c0_i32_1 = arith.constant 0 : i32
    return %c0_i32, %c0_i32_0 : i32, i32
  }
  func.func @transform_8(%arg0: i32) -> (i32, i32) {
    %c0_i32 = arith.constant 0 : i32
    %c0_i32_0 = arith.constant 0 : i32
    %c0_i32_1 = arith.constant 0 : i32
    return %c0_i32, %c0_i32_0 : i32, i32
  }
  func.func @transform_9(%arg0: i32) -> (i32, i32) {
    %c0_i32 = arith.constant 0 : i32
    %c0_i32_0 = arith.constant 0 : i32
    return %arg0, %c0_i32 : i32, i32
  }
}

</mosaic_0001>

<llo_original>
// kernel: diffusion_mlp_forward.1
$region0: #{diffusion_mlp_forward.1}
  #allocation0 [shape = 'u32[]', space=smem, size = 0x4, offset = 0x4, fixed_abs, tag = 'smem constant byte address 0x4 - core index']
  #allocation1 [shape = 'u32[144,128]{1,0:T(1,128)}', space=vmem, size = 0x12000, scoped, tag = 'internal scratch']
  %s0 = inlined_call_operand.vmem [shape: f32[8,16], index: 0, kind: input, shape index: {}]
  %s1 = inlined_call_operand.vmem [shape: f32[8,1], index: 1, kind: input, shape index: {}]
  %s2 = inlined_call_operand.vmem [shape: bf16[16,32], index: 2, kind: input, shape index: {}]
  %s3 = inlined_call_operand.hbm [shape: bf16[1,32], index: 3, kind: input, shape index: {}]
  %s4 = inlined_call_operand.vmem [shape: f32[1,32], index: 4, kind: input, shape index: {}]
  %s5 = inlined_call_operand.vmem [shape: bf16[32,32], index: 5, kind: input, shape index: {}]
  %s6 = inlined_call_operand.vmem [shape: f32[1,32], index: 6, kind: input, shape index: {}]
  %s7 = inlined_call_operand.vmem [shape: bf16[32,16], index: 7, kind: input, shape index: {}]
  %s8 = inlined_call_operand.vmem [shape: f32[1,16], index: 8, kind: input, shape index: {}]
  %s9 = inlined_call_operand.hbm [shape: f32[8,16], index: 9, kind: output, shape index: {}]
  %s10 = sld [smem:[#allocation0]]
  $region50: #{diffusion_mlp_forward.1} parent=0
    _
  %s12 = ssub.s32 1, %s10
  %s13 = scalar_select 0, %s12, %s10
  $region1: #{diffusion_mlp_forward.1} parent=0
    #allocation2 [shape = 'u8[512]{0}', space=vmem, size = 0x400, scoped, tag = 'input window, operand 3, single buffered']
    #allocation3 [shape = 's32[1]{0}', space=sflag, size = 0x4, scoped, tag = 'scoped memory for diffusion_mlp_forward.1']
    #allocation4 [shape = 's32[1]{0}', space=sflag, size = 0x4, scoped, tag = 'scoped memory for diffusion_mlp_forward.1']
    #allocation5 [shape = 'u8[4096]{0}', space=vmem, size = 0x1000, scoped, tag = 'output window, operand 0, single buffered']
    %14 = vsyncpa [#allocation3], 0
    %15 = vsyncpa [#allocation4], 0
    // Predicated region
    $region2: #{diffusion_mlp_forward.1} parent=1 // pred_check
      _
    $region3: #{diffusion_mlp_forward.1} parent=1 // pred_check_branch
      %17 = sbr.rel (0) target = $region5
    $region4: #{diffusion_mlp_forward.1} parent=1 // pred_region
      _
    $region5: #{diffusion_mlp_forward.1} parent=1 // pred_fallthru
      _
    // Predicated region
    $region6: #{diffusion_mlp_forward.1} parent=1 // pred_check
      _
    $region7: #{diffusion_mlp_forward.1} parent=1 // pred_check_branch
      %19 = sbr.rel (0) target = $region9
    $region8: #{diffusion_mlp_forward.1} parent=1 // pred_region
      _
    $region9: #{diffusion_mlp_forward.1} parent=1 // pred_fallthru
      _
    // Predicated region
    $region10: #{diffusion_mlp_forward.1} parent=1 // pred_check
      _
    $region11: #{diffusion_mlp_forward.1} parent=1 // pred_check_branch
      %21 = sbr.rel (0) target = $region13
    $region12: #{diffusion_mlp_forward.1} parent=1 // pred_region
      _
    $region13: #{diffusion_mlp_forward.1} parent=1 // pred_fallthru
      _
    // Predicated region
    $region14: #{diffusion_mlp_forward.1} parent=1 // pred_check
      _
    $region15: #{diffusion_mlp_forward.1} parent=1 // pred_check_branch
      %23 = sbr.rel (0) target = $region17
    $region16: #{diffusion_mlp_forward.1} parent=1 // pred_region
      %s25 = ssub.s32 16, 16
      %26 = vsyncadd [#allocation3], %s25
      %s28 = sshll.u32 [#allocation2], 4
      %s29 = int_to_ptr.vmem [resolvable:$true] %s28
      %31 = dma.hbm_to_vmem [thread:$0]  %s3, 16, %s29, [#allocation3]
    $region17: #{diffusion_mlp_forward.1} parent=1 // pred_fallthru
      _
    // Predicated region
    $region18: #{diffusion_mlp_forward.1} parent=1 // pred_check
      _
    $region19: #{diffusion_mlp_forward.1} parent=1 // pred_check_branch
      %33 = sbr.rel (0) target = $region21
    $region20: #{diffusion_mlp_forward.1} parent=1 // pred_region
      _
    $region21: #{diffusion_mlp_forward.1} parent=1 // pred_fallthru
      _
    // Predicated region
    $region22: #{diffusion_mlp_forward.1} parent=1 // pred_check
      _
    $region23: #{diffusion_mlp_forward.1} parent=1 // pred_check_branch
      %35 = sbr.rel (0) target = $region25
    $region24: #{diffusion_mlp_forward.1} parent=1 // pred_region
      _
    $region25: #{diffusion_mlp_forward.1} parent=1 // pred_fallthru
      _
    // Predicated region
    $region26: #{diffusion_mlp_forward.1} parent=1 // pred_check
      _
    $region27: #{diffusion_mlp_forward.1} parent=1 // pred_check_branch
      %37 = sbr.rel (0) target = $region29
    $region28: #{diffusion_mlp_forward.1} parent=1 // pred_region
      _
    $region29: #{diffusion_mlp_forward.1} parent=1 // pred_fallthru
      _
    // Predicated region
    $region30: #{diffusion_mlp_forward.1} parent=1 // pred_check
      _
    $region31: #{diffusion_mlp_forward.1} parent=1 // pred_check_branch
      %39 = sbr.rel (0) target = $region33
    $region32: #{diffusion_mlp_forward.1} parent=1 // pred_region
      _
    $region33: #{diffusion_mlp_forward.1} parent=1 // pred_fallthru
      _
    // Predicated region
    $region34: #{diffusion_mlp_forward.1} parent=1 // pred_check
      _
    $region35: #{diffusion_mlp_forward.1} parent=1 // pred_check_branch
      %41 = sbr.rel (0) target = $region37
    $region36: #{diffusion_mlp_forward.1} parent=1 // pred_region
      _
    $region37: #{diffusion_mlp_forward.1} parent=1 // pred_fallthru
      _
    // Predicated region
    $region38: #{diffusion_mlp_forward.1} parent=1 // pred_check
      _
    $region39: #{diffusion_mlp_forward.1} parent=1 // pred_check_branch
      %43 = sbr.rel (0) target = $region41
    $region40: #{diffusion_mlp_forward.1} parent=1 // pred_region
      %44 = dma.done [#allocation3], 16
    $region41: #{diffusion_mlp_forward.1} parent=1 // pred_fallthru
      _
    %v46 = vld [vmem:[%s0] sm:$0xff]
    %v47 = vpack.c.bf16 %v46, %v46
    %v48 = vld [vmem:[%s1] sm:$0xff]
    %v49 = vld [vmem:[%s2] sm:$0xf]
    %v50 = vld [vmem:[%s2 + $0x4] sm:$0xf]
    %v51 = vld [vmem:[#allocation2] sm:$0x1]
    %v52 = vunpack.c.l.bf16 %v51
    %54 = vset.pattern.permute.xlu0 0
    %55 = vperm.xlu0 %54, %v48
    %v56 = vpop.permute.xlu0 %55
    %v58 = vlaneseq
    %v59 = vshrl.u32 %v58, 7
    %v60 = vsub.s32 0, %v59
    %v61 = vrot.slane %v52, %v60
    %v62 = vmul.f32 %v56, %v61
    %v65 = vunpack.c.l.b16 %v49
    %v66 = vunpack.c.l.b16 %v50
    %v67 = vpack.c.b16 %v66, %v65
    %vm69 = vcmask 130048
    %v71 = vsel %vm69, %v47, 0
    %73 = vmatprep.subr.bf16.mxu0 0
    %74 = vmatpush1.bf16.msra.mxu0 0
    %75 = vmatprep.subr.bf16.mxu0 0
    %76 = vmatpush1.bf16.msra.mxu0 0
    %77 = vmatprep.subr.bf16.mxu0 0
    %78 = vmatpush1.bf16.msra.mxu0 0
    %79 = vmatprep.subr.bf16.mxu0 0
    %80 = vmatpush1.bf16.msra.mxu0 0
    %81 = vmatprep.subr.bf16.mxu0 0
    %82 = vmatpush1.bf16.msra.mxu0 0
    %83 = vmatprep.subr.bf16.mxu0 0
    %84 = vmatpush1.bf16.msra.mxu0 0
    %85 = vmatprep.subr.bf16.mxu0 0
    %86 = vmatpush1.bf16.msra.mxu0 0
    %87 = vmatprep.subr.bf16.mxu0 0
    %88 = vmatpush1.bf16.msra.mxu0 %v67
    %89 = vmatprep.subr.bf16.mxu0 0
    %90 = vmatpush2.bf16.msra.mxu0 0
    %91 = vmatprep.subr.bf16.mxu0 0
    %92 = vmatpush2.bf16.msra.mxu0 0
    %93 = vmatprep.subr.bf16.mxu0 0
    %94 = vmatpush2.bf16.msra.mxu0 0
    %95 = vmatprep.subr.bf16.mxu0 0
    %96 = vmatpush2.bf16.msra.mxu0 0
    %97 = vmatprep.subr.bf16.mxu0 0
    %98 = vmatpush2.bf16.msra.mxu0 0
    %99 = vmatprep.subr.bf16.mxu0 0
    %100 = vmatpush2.bf16.msra.mxu0 0
    %101 = vmatprep.subr.bf16.mxu0 0
    %102 = vmatpush2.bf16.msra.mxu0 0
    %103 = vmatprep.subr.bf16.mxu0 0
    %104 = vmatpush2.bf16.msra.mxu0 0
    %105 = vmatprep.mubr.bf16.mxu0 0
    %106 = vmatmul.mubr.bf16.gmra.mxu0 %v71
    %v107 = vpop.f32.mrf.mxu0
    %v108 = vadd.f32 %v62, %v107
    %v109 = vpop.f32.mrf.mxu0
    %v110 = vpop.f32.mrf.mxu0
    %v111 = vpop.f32.mrf.mxu0
    %112 = vdwg.mxu0
    %v113 = vld [vmem:[%s4] sm:$0x1]
    %v115 = vlaneseq
    %v116 = vshrl.u32 %v115, 7
    %v117 = vsub.s32 0, %v116
    %v118 = vrot.slane %v113, %v117
    %v120 = vadd.f32 %v108, %v118
    %v121 = vmax.f32 %v120, 0.0
    %v122 = vpack.c.bf16 %v121, %v121
    %v123 = vld [vmem:[%s5] sm:$0xf]
    %v124 = vld [vmem:[%s5 + $0x4] sm:$0xf]
    %v125 = vld [vmem:[%s5 + $0x8] sm:$0xf]
    %v126 = vld [vmem:[%s5 + $0xc] sm:$0xf]
    %v127 = vld [vmem:[%s6] sm:$0x1]
    %v129 = vlaneseq
    %v130 = vshrl.u32 %v129, 7
    %v131 = vsub.s32 0, %v130
    %v132 = vrot.slane %v127, %v131
    %v138 = vunpack.c.l.b16 %v123
    %v139 = vunpack.c.l.b16 %v124
    %v140 = vunpack.c.l.b16 %v125
    %v141 = vunpack.c.l.b16 %v126
    %v142 = vpack.c.b16 %v139, %v138
    %v143 = vpack.c.b16 %v141, %v140
    %vm146 = vcmask 261120
    %v148 = vsel %vm146, %v122, 0
    %150 = vmatprep.subr.bf16.mxu0 0
    %151 = vmatpush1.bf16.msra.mxu0 0
    %152 = vmatprep.subr.bf16.mxu0 0
    %153 = vmatpush1.bf16.msra.mxu0 0
    %154 = vmatprep.subr.bf16.mxu0 0
    %155 = vmatpush1.bf16.msra.mxu0 0
    %156 = vmatprep.subr.bf16.mxu0 0
    %157 = vmatpush1.bf16.msra.mxu0 0
    %158 = vmatprep.subr.bf16.mxu0 0
    %159 = vmatpush1.bf16.msra.mxu0 0
    %160 = vmatprep.subr.bf16.mxu0 0
    %161 = vmatpush1.bf16.msra.mxu0 0
    %162 = vmatprep.subr.bf16.mxu0 0
    %163 = vmatpush1.bf16.msra.mxu0 %v143
    %164 = vmatprep.subr.bf16.mxu0 0
    %165 = vmatpush1.bf16.msra.mxu0 %v142
    %166 = vmatprep.subr.bf16.mxu0 0
    %167 = vmatpush2.bf16.msra.mxu0 0
    %168 = vmatprep.subr.bf16.mxu0 0
    %169 = vmatpush2.bf16.msra.mxu0 0
    %170 = vmatprep.subr.bf16.mxu0 0
    %171 = vmatpush2.bf16.msra.mxu0 0
    %172 = vmatprep.subr.bf16.mxu0 0
    %173 = vmatpush2.bf16.msra.mxu0 0
    %174 = vmatprep.subr.bf16.mxu0 0
    %175 = vmatpush2.bf16.msra.mxu0 0
    %176 = vmatprep.subr.bf16.mxu0 0
    %177 = vmatpush2.bf16.msra.mxu0 0
    %178 = vmatprep.subr.bf16.mxu0 0
    %179 = vmatpush2.bf16.msra.mxu0 0
    %180 = vmatprep.subr.bf16.mxu0 0
    %181 = vmatpush2.bf16.msra.mxu0 0
    %182 = vmatprep.mubr.bf16.mxu0 0
    %183 = vmatmul.mubr.bf16.gmra.mxu0 %v148
    %v184 = vpop.f32.mrf.mxu0
    %v185 = vadd.f32 %v132, %v184
    %v186 = vpop.f32.mrf.mxu0
    %v187 = vpop.f32.mrf.mxu0
    %v188 = vpop.f32.mrf.mxu0
    %189 = vdwg.mxu0
    %v190 = vmax.f32 %v185, 0.0
    %v191 = vpack.c.bf16 %v190, %v190
    %v192 = vld [vmem:[%s7] sm:$0xf]
    %v193 = vld [vmem:[%s7 + $0x4] sm:$0xf]
    %v194 = vld [vmem:[%s7 + $0x8] sm:$0xf]
    %v195 = vld [vmem:[%s7 + $0xc] sm:$0xf]
    %v196 = vld [vmem:[%s8] sm:$0x1]
    %v198 = vlaneseq
    %v199 = vshrl.u32 %v198, 7
    %v200 = vsub.s32 0, %v199
    %v201 = vrot.slane %v196, %v200
    %v207 = vunpack.c.l.b16 %v192
    %v208 = vunpack.c.l.b16 %v193
    %v209 = vunpack.c.l.b16 %v194
    %v210 = vunpack.c.l.b16 %v195
    %v211 = vpack.c.b16 %v208, %v207
    %v212 = vpack.c.b16 %v210, %v209
    %v216 = vsel %vm146, %v191, 0
    %218 = vmatprep.subr.bf16.mxu0 0
    %219 = vmatpush1.bf16.msra.mxu0 0
    %220 = vmatprep.subr.bf16.mxu0 0
    %221 = vmatpush1.bf16.msra.mxu0 0
    %222 = vmatprep.subr.bf16.mxu0 0
    %223 = vmatpush1.bf16.msra.mxu0 0
    %224 = vmatprep.subr.bf16.mxu0 0
    %225 = vmatpush1.bf16.msra.mxu0 0
    %226 = vmatprep.subr.bf16.mxu0 0
    %227 = vmatpush1.bf16.msra.mxu0 0
    %228 = vmatprep.subr.bf16.mxu0 0
    %229 = vmatpush1.bf16.msra.mxu0 0
    %230 = vmatprep.subr.bf16.mxu0 0
    %231 = vmatpush1.bf16.msra.mxu0 %v212
    %232 = vmatprep.subr.bf16.mxu0 0
    %233 = vmatpush1.bf16.msra.mxu0 %v211
    %234 = vmatprep.subr.bf16.mxu0 0
    %235 = vmatpush2.bf16.msra.mxu0 0
    %236 = vmatprep.subr.bf16.mxu0 0
    %237 = vmatpush2.bf16.msra.mxu0 0
    %238 = vmatprep.subr.bf16.mxu0 0
    %239 = vmatpush2.bf16.msra.mxu0 0
    %240 = vmatprep.subr.bf16.mxu0 0
    %241 = vmatpush2.bf16.msra.mxu0 0
    %242 = vmatprep.subr.bf16.mxu0 0
    %243 = vmatpush2.bf16.msra.mxu0 0
    %244 = vmatprep.subr.bf16.mxu0 0
    %245 = vmatpush2.bf16.msra.mxu0 0
    %246 = vmatprep.subr.bf16.mxu0 0
    %247 = vmatpush2.bf16.msra.mxu0 0
    %248 = vmatprep.subr.bf16.mxu0 0
    %249 = vmatpush2.bf16.msra.mxu0 0
    %250 = vmatprep.mubr.bf16.mxu0 0
    %251 = vmatmul.mubr.bf16.gmra.mxu0 %v216
    %v252 = vpop.f32.mrf.mxu0
    %v253 = vadd.f32 %v201, %v252
    %v254 = vpop.f32.mrf.mxu0
    %v255 = vpop.f32.mrf.mxu0
    %v256 = vpop.f32.mrf.mxu0
    %257 = vdwg.mxu0
    %258 = vst.msk [vmem:[#allocation5] sm:$0xff] %vm69, %v253
    // Predicated region
    $region42: #{diffusion_mlp_forward.1} parent=1 // pred_check
      _
    $region43: #{diffusion_mlp_forward.1} parent=1 // pred_check_branch
      %260 = sbr.rel (0) target = $region45
    $region44: #{diffusion_mlp_forward.1} parent=1 // pred_region
      %s262 = ssub.s32 128, 128
      %263 = vsyncadd [#allocation4], %s262
      %s265 = sshll.u32 [#allocation5], 4
      %s266 = int_to_ptr.vmem [resolvable:$true] %s265
      %268 = dma.vmem_to_hbm [thread:$0]  %s266, 128, %s9, [#allocation4]
    $region45: #{diffusion_mlp_forward.1} parent=1 // pred_fallthru
      _
    // Predicated region
    $region46: #{diffusion_mlp_forward.1} parent=1 // pred_check
      _
    $region47: #{diffusion_mlp_forward.1} parent=1 // pred_check_branch
      %270 = sbr.rel (0) target = $region49
    $region48: #{diffusion_mlp_forward.1} parent=1 // pred_region
      %271 = dma.done [#allocation4], 128
    $region49: #{diffusion_mlp_forward.1} parent=1 // pred_fallthru
      _
    %272 = vsyncpa [#allocation3], 1
    %273 = vsyncpa [#allocation4], 1

</llo_original>
